<compile_context>
chip_gen: v7x
topology: tpu7x:2x2x1
jax: 0.10.0
libtpu: 0.0.40
codegen_flags: <defaults>
</compile_context>

<pallas_src>
import functools

import jax
import jax.numpy as jnp
from jax.experimental import pallas as pl
from jax.experimental.pallas import tpu as pltpu

_LANE = 128


def _self_attention_kernel(x_ref, wkqv_ref, bkqv_ref, bf_ref, gamma_ref,
                           o_ref, k_sc, q_sc, vf_sc, *, ci, hw, tj):
    jj = pl.program_id(1)
    j0 = pl.multiple_of(jj * tj, _LANE)

    # Per-batch projection cache: computed once per batch slab (j == 0) and reused
    # for every key-column tile.  Valid because the j grid axis is "arbitrary"
    # (sequential on one core) while B is the parallel/megacore axis.
    @pl.when(jj == 0)
    def _():
        x = x_ref[0]                                                 # (C, HW_pad) f32
        # Fused projection [wk; wq; wf@wv] @ x + [bk; bq; wf@bv]: conv_final is
        # already folded into the value rows, so no separate (C, Ci) matmul later.
        kqv = jnp.dot(wkqv_ref[...], x,
                      preferred_element_type=jnp.float32) + bkqv_ref[...]
        k_sc[...] = kqv[0 * ci:1 * ci, :].astype(jnp.bfloat16)       # (Ci, HW_pad)
        q_sc[...] = kqv[1 * ci:2 * ci, :].astype(jnp.bfloat16)       # (Ci, HW_pad)
        vf_sc[...] = kqv[2 * ci:, :].astype(jnp.bfloat16)            # (C,  HW_pad)

    k_t = k_sc[:, pl.ds(j0, tj)]                                     # (Ci, Tj) bf16

    # scores a[i, j] = q_i . k_j -- contract the (tiny) channel axis of both
    # operands directly (MXU transposed-LHS path).  If Mosaic ever materializes an
    # XLU transpose of q here, cache q pre-transposed at j == 0 instead.
    a = jax.lax.dot_general(
        q_sc[...], k_t,
        dimension_numbers=(((0,), (0,)), ((), ())),
        preferred_element_type=jnp.float32)                          # (HW_pad, Tj)

    hw_pad = a.shape[0]
    if hw_pad != hw:  # compile-time branch: mask padded query rows out of softmax
        # (HW_pad, 1) additive mask broadcast into the tile: one VPU add instead of
        # a full-tile iota + compare + select.
        row = jax.lax.broadcasted_iota(jnp.int32, (hw_pad, 1), 0)
        a = a + jnp.where(row < hw, 0.0, -1e30).astype(jnp.float32)

    # torch softmax(dim=1) == softmax over the query axis (axis 0 here), with the
    # normalization deferred past the value matmul.
    e = jnp.exp(a - jnp.max(a, axis=0, keepdims=True))               # (HW_pad, Tj)
    denom = jnp.sum(e, axis=0, keepdims=True)                        # (1, Tj) f32

    # r[c, j] = (sum_i vf[c, i] * e[i, j]) / denom[j] + bf[c]
    av = jnp.dot(vf_sc[...], e.astype(jnp.bfloat16),
                 preferred_element_type=jnp.float32)                 # (C, Tj)
    r = av * pl.reciprocal(denom, approx=True) + bf_ref[...]         # (C, Tj)

    x_t = x_ref[0, :, pl.ds(j0, tj)]                                 # residual tile
    o_ref[0] = gamma_ref[0, 0] * r + x_t


def _vmem_capacity_bytes():
    """Per-core VMEM capacity; conservative 64 MiB (v7x) if the query fails."""
    try:
        info = pltpu.get_tpu_info()
        for attr in ("vmem_capacity_bytes", "vmem_size_bytes", "vmem_bytes"):
            v = getattr(info, attr, None)
            if v:
                return int(v)
    except Exception:
        pass
    return 64 * 1024 * 1024


def _pick_tj(hw_pad, c, ci, vmem_cap):
    """Largest key-column tile (lane multiple, preferring 256-aligned tiles for the
    256-wide MXU on v6e/v7x) whose per-step temporaries fit the per-core VMEM."""
    resident = (2 * c * hw_pad * 4               # x slab (double-buffered)
                + (2 * ci + c) * hw_pad * 2      # cached bf16 k/q/vf scratch
                + (2 * ci + c) * hw_pad * 4)     # f32 projection value at j == 0
    budget = int(0.55 * vmem_cap) - resident
    per_elem = 14                                # a f32 + e f32 + e bf16 + slack
    cands = sorted((t for t in range(_LANE, hw_pad + 1, _LANE) if hw_pad % t == 0),
                   reverse=True)
    for prefer_256 in (True, False):
        for t in cands:
            if prefer_256 and t % 256:
                continue
            if per_elem * hw_pad * t <= budget:
                return t
    return _LANE


def self_attention_pallas(x, wk, bk, wq, bq, wv, bv, wf, bf, gamma, *, tj=None):
    B, C, H, W = x.shape
    HW = H * W
    Ci = wk.shape[0]

    hw_pad = ((HW + _LANE - 1) // _LANE) * _LANE
    xf = x.reshape(B, C, HW)
    if hw_pad != HW:
        xf = jnp.pad(xf, ((0, 0), (0, 0), (0, hw_pad - HW)))

    # Fold conv_final into the value projection:
    #   r = wf @ ((wv @ x + bv) @ p) + bf = ((wf @ wv) @ x + wf @ bv) @ p + bf
    wvf = wf @ wv                                                    # (C, C)
    bvf = wf @ bv                                                    # (C,)
    wkqv = jnp.concatenate([wk, wq, wvf], axis=0)                    # (2Ci + C, C)
    bkqv = jnp.concatenate([bk, bq, bvf], axis=0).reshape(2 * Ci + C, 1)

    cap = _vmem_capacity_bytes()
    if tj is None:
        tj = _pick_tj(hw_pad, C, Ci, cap)
    else:
        tj = max(_LANE, min((tj // _LANE) * _LANE, hw_pad))
        while hw_pad % tj:
            tj -= _LANE
    n_j = hw_pad // tj
    # TODO(synk): for very large HW (where even Tj=128 overflows per-core VMEM) also
    # tile the query axis with a flash-style online softmax to bound the e/q slabs.

    kernel = functools.partial(_self_attention_kernel, ci=Ci, hw=HW, tj=tj)

    # Generation-aware scoped-VMEM: sized to the actual working set with headroom,
    # clamped to 75% of the physical per-core budget (64 MiB v7x, 128 MiB v5e/v6e).
    work = (2 * C * hw_pad * 4                    # x slab (double-buffered)
            + (2 * Ci + C) * hw_pad * 6           # bf16 scratch + f32 projection
            + 14 * hw_pad * tj                    # a/e f32 + e bf16 temporaries
            + 2 * C * tj * 4                      # double-buffered output tile
            + 4 * (2 * Ci + C) * (C + 1))         # weights / biases
    vmem_limit = int(min(max(2 * work, 32 * 1024 * 1024), int(0.75 * cap)))

    def full(shape):
        return pl.BlockSpec(shape, lambda b, j: tuple(0 for _ in shape))

    out = pl.pallas_call(
        kernel,
        out_shape=jax.ShapeDtypeStruct((B, C, hw_pad), jnp.float32),
        grid=(B, n_j),
        in_specs=[
            pl.BlockSpec((1, C, hw_pad), lambda b, j: (b, 0, 0)),    # x, one batch slab
            full((2 * Ci + C, C)), full((2 * Ci + C, 1)),            # fused kq+vf w / b
            full((C, 1)),                                            # conv_final bias
            pl.BlockSpec(memory_space=pltpu.MemorySpace.SMEM),       # gamma scalar
        ],
        out_specs=pl.BlockSpec((1, C, tj), lambda b, j: (b, 0, j)),
        scratch_shapes=[
            pltpu.VMEM((Ci, hw_pad), jnp.bfloat16),                  # k cache
            pltpu.VMEM((Ci, hw_pad), jnp.bfloat16),                  # q cache
            pltpu.VMEM((C, hw_pad), jnp.bfloat16),                   # wf-folded v cache
        ],
        compiler_params=pltpu.CompilerParams(
            # j must be "arbitrary": the per-batch kqv cache is filled at j == 0 and
            # reused across key tiles.  B stays "parallel" for megacore sharding
            # (on v7x keep B >= 2 so both TensorCores get work).
            dimension_semantics=("parallel", "arbitrary"),
            vmem_limit_bytes=vmem_limit),
    )(xf, wkqv, bkqv, bf.reshape(C, 1), gamma.reshape(1, 1))

    return out[:, :, :HW].reshape(B, C, H, W)


def self_attention_ref(x, wk, bk, wq, bq, wv, bv, wf, bf, gamma):
    B, C, H, W = x.shape
    xf = x.reshape(B, C, H * W)
    k = jnp.einsum('oc,bcs->bos', wk, xf) + bk[None, :, None]
    q = jnp.einsum('oc,bcs->bos', wq, xf) + bq[None, :, None]
    v = jnp.einsum('oc,bcs->bos', wv, xf) + bv[None, :, None]
    a = jnp.einsum('bis,bit->bst', q, k)          # (B, HW, HW), a[b,i,j] = q_i . k_j
    p = jax.nn.softmax(a, axis=1)                 # torch softmax(dim=1)
    av = jnp.einsum('bcs,bst->bct', v, p)
    r = jnp.einsum('oc,bcs->bos', wf, av) + bf[None, :, None]
    return (gamma[0] * r + xf).reshape(B, C, H, W)


if __name__ == "__main__":
    def run_case(B, C, H, W, tj=None):
        Ci = C // 8  # inter_channels default = in_channels // 8
        key = jax.random.PRNGKey(0)
        ks = jax.random.split(key, 10)
        x = jax.random.normal(ks[0], (B, C, H, W), dtype=jnp.float32)

        # Deterministic synthetic parameters (shapes match nn.Conv2d(k=1) weights).
        wk = 0.1 * jax.random.normal(ks[1], (Ci, C), dtype=jnp.float32)
        bk = 0.1 * jax.random.normal(ks[2], (Ci,), dtype=jnp.float32)
        wq = 0.1 * jax.random.normal(ks[3], (Ci, C), dtype=jnp.float32)
        bq = 0.1 * jax.random.normal(ks[4], (Ci,), dtype=jnp.float32)
        wv = 0.1 * jax.random.normal(ks[5], (Ci, C), dtype=jnp.float32)
        bv = 0.1 * jax.random.normal(ks[6], (Ci,), dtype=jnp.float32)
        wf = 0.1 * jax.random.normal(ks[7], (C, Ci), dtype=jnp.float32)
        bf = 0.1 * jax.random.normal(ks[8], (C,), dtype=jnp.float32)
        # Module __init__ sets gamma = 0 (output == X); use a nonzero value so the
        # attention path is actually exercised.
        gamma = jnp.array([0.5], dtype=jnp.float32)

        out = self_attention_pallas(x, wk, bk, wq, bq, wv, bv, wf, bf, gamma, tj=tj)
        out = jax.block_until_ready(out)

        ref = self_attention_ref(x, wk, bk, wq, bq, wv, bv, wf, bf, gamma)
        assert out.shape == (B, C, H, W)
        # Tolerance relaxed (1e-2) for bf16 MXU inputs + approx EUP reciprocal;
        # max-subtraction, exp and sums stay in f32.
        assert jnp.allclose(out, ref, atol=1e-2, rtol=1e-2), "mismatch vs JAX reference"

    # 8x8 spatial (HW=64 padded to 128): exercises the padded-query-row mask path.
    run_case(2, 32, 8, 8)
    # 16x16 spatial (HW=256, no padding) with forced Tj=128: exercises the per-batch
    # kqv cache being reused across multiple key-column tiles (n_j > 1).
    run_case(2, 32, 16, 16, tj=128)

    print("KERNEL_OK")
</pallas_src>

<mosaic_0001>
module attributes {stable_mosaic.version = 11 : i64} {
  func.func @_self_attention_kernel(%arg0: i32, %arg1: i32, %arg2: memref<1x32x128xf32, #tpu.memory_space<vmem>>, %arg3: memref<40x32xf32, #tpu.memory_space<vmem>>, %arg4: memref<40x1xf32, #tpu.memory_space<vmem>>, %arg5: memref<32x1xf32, #tpu.memory_space<vmem>>, %arg6: memref<1x1xf32, #tpu.memory_space<smem>>, %arg7: memref<1x32x128xf32, #tpu.memory_space<vmem>>, %arg8: memref<4x128xbf16, #tpu.memory_space<vmem>>, %arg9: memref<4x128xbf16, #tpu.memory_space<vmem>>, %arg10: memref<32x128xbf16, #tpu.memory_space<vmem>>) attributes {dimension_semantics = [#tpu.dimension_semantics<parallel>, #tpu.dimension_semantics<arbitrary>], iteration_bounds = array<i64: 2, 1>, scalar_prefetch = 0 : i64, scratch_operands = 3 : i64, tpu.core_type = #tpu.core_type<tc>, window_params = [{transform_indices = @transform_0, window_bounds = array<i64: 1, 32, 128>}, {pipeline_mode = #tpu.pipeline_mode<synchronous>, transform_indices = @transform_1, window_bounds = array<i64: 40, 32>}, {pipeline_mode = #tpu.pipeline_mode<synchronous>, transform_indices = @transform_2, window_bounds = array<i64: 40, 1>}, {pipeline_mode = #tpu.pipeline_mode<synchronous>, transform_indices = @transform_3, window_bounds = array<i64: 32, 1>}, {transform_indices = @transform_4, window_bounds = array<i64: 1, 1>}, {transform_indices = @transform_5, window_bounds = array<i64: 1, 32, 128>}]} {
    %c128_i32 = arith.constant 128 : i32
    %0 = arith.muli %arg1, %c128_i32 : i32
    %1 = tpu.assume_multiple %0, 128 : i32
    %c0_i32 = arith.constant 0 : i32
    %2 = arith.cmpi eq, %arg1, %c0_i32 : i32
    %3 = arith.extui %2 : i1 to i32
    %c0_i32_0 = arith.constant 0 : i32
    %4 = arith.cmpi ne, %3, %c0_i32_0 : i32
    scf.if %4 {
      %c0_19 = arith.constant 0 : index
      %c0_20 = arith.constant 0 : index
      %c0_21 = arith.constant 0 : index
      %43 = vector.load %arg2[%c0_19, %c0_20, %c0_21] : memref<1x32x128xf32, #tpu.memory_space<vmem>>, vector<1x32x128xf32>
      %44 = vector.shape_cast %43 : vector<1x32x128xf32> to vector<32x128xf32>
      %c0_22 = arith.constant 0 : index
      %c0_23 = arith.constant 0 : index
      %45 = vector.load %arg3[%c0_22, %c0_23] : memref<40x32xf32, #tpu.memory_space<vmem>>, vector<40x32xf32>
      %cst_24 = arith.constant dense<0.000000e+00> : vector<40x128xf32>
      %46 = tpu.matmul %45, %44, %cst_24 {dimension_numbers = #tpu.dot_dimension_numbers<[1], [0], [0], [1], [0, 0, 1, 1], [], []>} : vector<40x32xf32>, vector<32x128xf32>, vector<40x128xf32> -> vector<40x128xf32>
      %c0_25 = arith.constant 0 : index
      %c0_26 = arith.constant 0 : index
      %47 = vector.load %arg4[%c0_25, %c0_26] : memref<40x1xf32, #tpu.memory_space<vmem>>, vector<40x1xf32>
      %48 = vector.broadcast %47 : vector<40x1xf32> to vector<40x128xf32>
      %49 = arith.addf %46, %48 : vector<40x128xf32>
      %50 = vector.extract_strided_slice %49 {offsets = [0, 0], sizes = [4, 128], strides = [1, 1]} : vector<40x128xf32> to vector<4x128xf32>
      %51 = arith.truncf %50 : vector<4x128xf32> to vector<4x128xbf16>
      %c0_27 = arith.constant 0 : index
      %c0_28 = arith.constant 0 : index
      %52 = vector.load %arg8[%c0_27, %c0_28] : memref<4x128xbf16, #tpu.memory_space<vmem>>, vector<4x128xbf16>
      tpu.vector_store %arg8[%c0_27, %c0_28], %51 {strides = array<i32>} : memref<4x128xbf16, #tpu.memory_space<vmem>>, vector<4x128xbf16>,
      %53 = vector.extract_strided_slice %49 {offsets = [4, 0], sizes = [4, 128], strides = [1, 1]} : vector<40x128xf32> to vector<4x128xf32>
      %54 = arith.truncf %53 : vector<4x128xf32> to vector<4x128xbf16>
      %c0_29 = arith.constant 0 : index
      %c0_30 = arith.constant 0 : index
      %55 = vector.load %arg9[%c0_29, %c0_30] : memref<4x128xbf16, #tpu.memory_space<vmem>>, vector<4x128xbf16>
      tpu.vector_store %arg9[%c0_29, %c0_30], %54 {strides = array<i32>} : memref<4x128xbf16, #tpu.memory_space<vmem>>, vector<4x128xbf16>,
      %56 = vector.extract_strided_slice %49 {offsets = [8, 0], sizes = [32, 128], strides = [1, 1]} : vector<40x128xf32> to vector<32x128xf32>
      %57 = arith.truncf %56 : vector<32x128xf32> to vector<32x128xbf16>
      %c0_31 = arith.constant 0 : index
      %c0_32 = arith.constant 0 : index
      %58 = vector.load %arg10[%c0_31, %c0_32] : memref<32x128xbf16, #tpu.memory_space<vmem>>, vector<32x128xbf16>
      tpu.vector_store %arg10[%c0_31, %c0_32], %57 {strides = array<i32>} : memref<32x128xbf16, #tpu.memory_space<vmem>>, vector<32x128xbf16>,
    } else {
    }
    %c0 = arith.constant 0 : index
    %5 = arith.index_cast %1 : i32 to index
    %6 = vector.load %arg8[%c0, %5] : memref<4x128xbf16, #tpu.memory_space<vmem>>, vector<4x128xbf16>
    %c0_1 = arith.constant 0 : index
    %c0_2 = arith.constant 0 : index
    %7 = vector.load %arg9[%c0_1, %c0_2] : memref<4x128xbf16, #tpu.memory_space<vmem>>, vector<4x128xbf16>
    %cst = arith.constant dense<0.000000e+00> : vector<128x128xf32>
    %8 = tpu.matmul %7, %6, %cst {dimension_numbers = #tpu.dot_dimension_numbers<[0], [0], [1], [1], [0, 1, 1, 1], [], []>} : vector<4x128xbf16>, vector<4x128xbf16>, vector<128x128xf32> -> vector<128x128xf32>
    %9 = tpu.iota {dimensions = array<i32: 0>} : vector<128x1xi32>
    %c64_i32 = arith.constant 64 : i32
    %10 = vector.broadcast %c64_i32 : i32 to vector<128x1xi32>
    %11 = arith.cmpi slt, %9, %10 : vector<128x1xi32>
    %cst_3 = arith.constant 0.000000e+00 : f32
    %cst_4 = arith.constant -1.000000e+30 : f32
    %12 = vector.broadcast %cst_3 : f32 to vector<128x1xf32>
    %13 = vector.broadcast %cst_4 : f32 to vector<128x1xf32>
    %14 = arith.select %11, %12, %13 : vector<128x1xi1>, vector<128x1xf32>
    %15 = vector.broadcast %14 : vector<128x1xf32> to vector<128x128xf32>
    %16 = arith.addf %8, %15 : vector<128x128xf32>
    %cst_5 = arith.constant dense<0xFF800000> : vector<128xf32>
    %17 = vector.multi_reduction <maximumf>, %16, %cst_5 [0] : vector<128x128xf32> to vector<128xf32>
    %18 = vector.shape_cast %17 : vector<128xf32> to vector<1x128xf32>
    %19 = vector.broadcast %18 : vector<1x128xf32> to vector<128x128xf32>
    %20 = arith.subf %16, %19 : vector<128x128xf32>
    %21 = math.exp %20 : vector<128x128xf32>
    %cst_6 = arith.constant dense<0.000000e+00> : vector<128xf32>
    %22 = vector.multi_reduction <add>, %21, %cst_6 [0] : vector<128x128xf32> to vector<128xf32>
    %23 = vector.shape_cast %22 : vector<128xf32> to vector<1x128xf32>
    %c0_7 = arith.constant 0 : index
    %c0_8 = arith.constant 0 : index
    %24 = vector.load %arg10[%c0_7, %c0_8] : memref<32x128xbf16, #tpu.memory_space<vmem>>, vector<32x128xbf16>
    %25 = arith.truncf %21 : vector<128x128xf32> to vector<128x128xbf16>
    %cst_9 = arith.constant dense<0.000000e+00> : vector<32x128xf32>
    %26 = tpu.matmul %24, %25, %cst_9 {dimension_numbers = #tpu.dot_dimension_numbers<[1], [0], [0], [1], [0, 0, 1, 1], [], []>} : vector<32x128xbf16>, vector<128x128xbf16>, vector<32x128xf32> -> vector<32x128xf32>
    %27 = tpu.reciprocal %23 {approx = true} : vector<1x128xf32> -> vector<1x128xf32>
    %28 = vector.broadcast %27 : vector<1x128xf32> to vector<32x128xf32>
    %29 = arith.mulf %26, %28 : vector<32x128xf32>
    %c0_10 = arith.constant 0 : index
    %c0_11 = arith.constant 0 : index
    %30 = vector.load %arg5[%c0_10, %c0_11] : memref<32x1xf32, #tpu.memory_space<vmem>>, vector<32x1xf32>
    %31 = vector.broadcast %30 : vector<32x1xf32> to vector<32x128xf32>
    %32 = arith.addf %29, %31 : vector<32x128xf32>
    %c0_12 = arith.constant 0 : index
    %c0_13 = arith.constant 0 : index
    %33 = arith.index_cast %1 : i32 to index
    %34 = vector.load %arg2[%c0_12, %c0_13, %33] : memref<1x32x128xf32, #tpu.memory_space<vmem>>, vector<1x32x128xf32>
    %35 = vector.shape_cast %34 : vector<1x32x128xf32> to vector<32x128xf32>
    %c0_14 = arith.constant 0 : index
    %c0_15 = arith.constant 0 : index
    %36 = memref.load %arg6[%c0_14, %c0_15] : memref<1x1xf32, #tpu.memory_space<smem>>
    %37 = vector.broadcast %36 : f32 to vector<32x128xf32>
    %38 = arith.mulf %37, %32 : vector<32x128xf32>
    %39 = arith.addf %38, %35 : vector<32x128xf32>
    %c0_16 = arith.constant 0 : index
    %c0_17 = arith.constant 0 : index
    %c0_18 = arith.constant 0 : index
    %40 = vector.load %arg7[%c0_16, %c0_17, %c0_18] : memref<1x32x128xf32, #tpu.memory_space<vmem>>, vector<1x32x128xf32>
    %41 = vector.shape_cast %40 : vector<1x32x128xf32> to vector<32x128xf32>
    %42 = vector.shape_cast %39 : vector<32x128xf32> to vector<1x32x128xf32>
    tpu.vector_store %arg7[%c0_16, %c0_17, %c0_18], %42 {strides = array<i32>} : memref<1x32x128xf32, #tpu.memory_space<vmem>>, vector<1x32x128xf32>,
    return
  }
  func.func @transform_0(%arg0: i32, %arg1: i32) -> (i32, i32, i32) {
    %c0_i32 = arith.constant 0 : i32
    %c0_i32_0 = arith.constant 0 : i32
    %c0_i32_1 = arith.constant 0 : i32
    return %arg0, %c0_i32, %c0_i32_0 : i32, i32, i32
  }
  func.func @transform_1(%arg0: i32, %arg1: i32) -> (i32, i32) {
    %c0_i32 = arith.constant 0 : i32
    %c0_i32_0 = arith.constant 0 : i32
    %c0_i32_1 = arith.constant 0 : i32
    return %c0_i32, %c0_i32_0 : i32, i32
  }
  func.func @transform_2(%arg0: i32, %arg1: i32) -> (i32, i32) {
    %c0_i32 = arith.constant 0 : i32
    %c0_i32_0 = arith.constant 0 : i32
    %c0_i32_1 = arith.constant 0 : i32
    return %c0_i32, %c0_i32_0 : i32, i32
  }
  func.func @transform_3(%arg0: i32, %arg1: i32) -> (i32, i32) {
    %c0_i32 = arith.constant 0 : i32
    %c0_i32_0 = arith.constant 0 : i32
    %c0_i32_1 = arith.constant 0 : i32
    return %c0_i32, %c0_i32_0 : i32, i32
  }
  func.func @transform_4(%arg0: i32, %arg1: i32) -> (i32, i32) {
    %c0_i32 = arith.constant 0 : i32
    %c0_i32_0 = arith.constant 0 : i32
    %c0_i32_1 = arith.constant 0 : i32
    return %c0_i32, %c0_i32_0 : i32, i32
  }
  func.func @transform_5(%arg0: i32, %arg1: i32) -> (i32, i32, i32) {
    %c0_i32 = arith.constant 0 : i32
    %c0_i32_0 = arith.constant 0 : i32
    return %arg0, %c0_i32, %arg1 : i32, i32, i32
  }
}

</mosaic_0001>

<llo_original>
// kernel: tpu_custom_call.1
$region0: #{tpu_custom_call.1}
  #allocation0 [shape = 'u32[]', space=smem, size = 0x4, offset = 0x4, fixed_abs, tag = 'smem constant byte address 0x4 - core index']
  #allocation1 [shape = 'u32[144,128]{1,0:T(1,128)}', space=vmem, size = 0x12000, scoped, tag = 'internal scratch']
  #allocation2 [shape = 'bf16[4,128]{1,0:T(4,128)(2,1)}', space=vmem, size = 0x400, scoped, tag = 'scratch operand']
  #allocation3 [shape = 'bf16[4,128]{1,0:T(4,128)(2,1)}', space=vmem, size = 0x400, scoped, tag = 'scratch operand']
  #allocation4 [shape = 'bf16[32,128]{1,0:T(16,128)(2,1)}', space=vmem, size = 0x2000, scoped, tag = 'scratch operand']
  #allocation5 [shape = 'f32[1,1]{1,0:T(1,128)S(6)}', space=smem, size = 0x200, scoped, tag = 'scoped memory for tpu_custom_call.1']
  %s0 = inlined_call_operand.vmem [shape: f32[2,32,128], index: 0, kind: input, shape index: {}]
  %s1 = inlined_call_operand.vmem [shape: f32[40,32], index: 1, kind: input, shape index: {}]
  %s2 = inlined_call_operand.vmem [shape: f32[40,1], index: 2, kind: input, shape index: {}]
  %s3 = inlined_call_operand.vmem [shape: f32[32,1], index: 3, kind: input, shape index: {}]
  %s4 = inlined_call_operand.<no memory space> [shape: f32[1,1], index: 4, kind: input, shape index: {}]
  %s5 = inlined_call_operand.hbm [shape: f32[2,32,128], index: 5, kind: output, shape index: {}]
  %s6 = sld [smem:[#allocation0]]
  $region57: #{tpu_custom_call.1} parent=0
    _
  %s8 = ssub.s32 1, %s6
  %s9 = scalar_select 0, %s8, %s6
  %10 = sst [smem:[#allocation5]] %s4
  $region1: #{tpu_custom_call.1} parent=0
    #allocation6 [shape = 'u8[32768]{0}', space=vmem, size = 0x8000, scoped, tag = 'output window, operand 0']
    #allocation7 [shape = 's32[2]{0}', space=sflag, size = 0x8, scoped, tag = 'scoped memory for tpu_custom_call.1']
    %11 = vsyncpa [#allocation7], 0
    %s12 = scalar_lea.sflag [#allocation7], 1
    %13 = vsyncpa %s12, 0
    loop: start=0, step=1, limit=4
    $region2: #{tpu_custom_call.1} parent=1 // loop_pre_header
      _
    $region3: #{tpu_custom_call.1} parent=1 // loop_header
      %s15 = sphi 0, %s19
      %p16 = scmp.ge.s32.totalorder %s15, 4
      %s22 = sphi 0, %s34
      %s23 = sphi 0, %s30
      %s24 = sphi 0, %s22
      %s25 = sphi 0, %s23
      %s26 = sphi 0, %s24
      %s27 = sphi 0, %s25
      %s37 = sphi 0, %s39
      %s40 = sphi 0, %s37
      %s41 = sphi 0, %s40
      %s57 = sphi 0, %s41
      %s61 = sphi 0, %s61
      %s63 = sphi 0, %s61
      %s64 = sphi 0, %s63
      %s78 = sphi 0, %s64
      %s82 = sphi 0, %s82
      %s84 = sphi 0, %s82
      %s85 = sphi 0, %s84
      %s99 = sphi 0, %s85
      %s103 = sphi 0, %s103
      %s105 = sphi 0, %s103
      %s106 = sphi 0, %s105
      %s120 = sphi 0, %s106
      %s124 = sphi 0, %s124
      %s126 = sphi 0, %s124
      %s127 = sphi 0, %s126
      %s141 = sphi 0, %s127
      %s149 = sphi 0, %s151
      %s152 = sphi 0, %s149
      %s153 = sphi 0, %s152
      %s169 = sphi 0, %s153
    $region4: #{tpu_custom_call.1} parent=1 // loop_header_branch
      %18 = sbr.rel (%p16) target = $region8
    $region5: #{tpu_custom_call.1} parent=1 // loop_body
      %s20 = ssub.s32 %s15, 1
      %s21 = ssub.s32 %s15, 2
      %s28 = sadd.s32 1, %s23
      %p29 = scmp.ge.s32.totalorder %s28, 1
      %s30 = scalar_select %p29, 0, %s28
      %s31 = sadd.s32 1, %s22
      %s32 = scalar_select %p29, %s31, %s22
      %p33 = scmp.ge.s32.totalorder %s32, 2
      %s34 = scalar_select %p33, 0, %s32
      %s35 = ssub.s32 %s22, %s34
      %p36 = scmp.eq.s32.totalorder %s35, 0
      %s38 = sadd.s32 %s37, 1
      %s39 = scalar_select %p36, %s37, %s38
      %p42 = pneg %p36
      %p43 = scmp.eq.s32.totalorder %s15, 1
      %p44 = por %p42, %p43
      %p45 = scmp.ne.s32.totalorder %s37, %s40
      %p46 = scmp.eq.s32.totalorder %s15, 0
      %p47 = por %p45, %p46
      %p48 = scmp.ne.s32.totalorder %s37, %s40
      %p49 = scmp.eq.s32.totalorder %s20, 1
      %p50 = por %p48, %p49
      %p51 = scmp.ne.s32.totalorder %s40, %s41
      %p52 = scmp.eq.s32.totalorder %s20, 0
      %p53 = por %p51, %p52
      %p54 = scmp.ne.s32.totalorder %s40, %s41
      %p55 = scmp.eq.s32.totalorder %s21, 1
      %p56 = por %p54, %p55
      %p58 = scmp.ne.s32.totalorder %s41, %s57
      %p59 = scmp.eq.s32.totalorder %s21, 0
      %p60 = por %p58, %p59
      %s62 = sadd.s32 %s61, 1
      %p65 = scmp.eq.s32.totalorder %s15, 1
      %p66 = scmp.ne.s32.totalorder %s61, %s63
      %p67 = scmp.eq.s32.totalorder %s15, 0
      %p68 = por %p66, %p67
      %p69 = scmp.ne.s32.totalorder %s61, %s63
      %p70 = scmp.eq.s32.totalorder %s20, 1
      %p71 = por %p69, %p70
      %p72 = scmp.ne.s32.totalorder %s63, %s64
      %p73 = scmp.eq.s32.totalorder %s20, 0
      %p74 = por %p72, %p73
      %p75 = scmp.ne.s32.totalorder %s63, %s64
      %p76 = scmp.eq.s32.totalorder %s21, 1
      %p77 = por %p75, %p76
      %p79 = scmp.ne.s32.totalorder %s64, %s78
      %p80 = scmp.eq.s32.totalorder %s21, 0
      %p81 = por %p79, %p80
      %s83 = sadd.s32 %s82, 1
      %p86 = scmp.eq.s32.totalorder %s15, 1
      %p87 = scmp.ne.s32.totalorder %s82, %s84
      %p88 = scmp.eq.s32.totalorder %s15, 0
      %p89 = por %p87, %p88
      %p90 = scmp.ne.s32.totalorder %s82, %s84
      %p91 = scmp.eq.s32.totalorder %s20, 1
      %p92 = por %p90, %p91
      %p93 = scmp.ne.s32.totalorder %s84, %s85
      %p94 = scmp.eq.s32.totalorder %s20, 0
      %p95 = por %p93, %p94
      %p96 = scmp.ne.s32.totalorder %s84, %s85
      %p97 = scmp.eq.s32.totalorder %s21, 1
      %p98 = por %p96, %p97
      %p100 = scmp.ne.s32.totalorder %s85, %s99
      %p101 = scmp.eq.s32.totalorder %s21, 0
      %p102 = por %p100, %p101
      %s104 = sadd.s32 %s103, 1
      %p107 = scmp.eq.s32.totalorder %s15, 1
      %p108 = scmp.ne.s32.totalorder %s103, %s105
      %p109 = scmp.eq.s32.totalorder %s15, 0
      %p110 = por %p108, %p109
      %p111 = scmp.ne.s32.totalorder %s103, %s105
      %p112 = scmp.eq.s32.totalorder %s20, 1
      %p113 = por %p111, %p112
      %p114 = scmp.ne.s32.totalorder %s105, %s106
      %p115 = scmp.eq.s32.totalorder %s20, 0
      %p116 = por %p114, %p115
      %p117 = scmp.ne.s32.totalorder %s105, %s106
      %p118 = scmp.eq.s32.totalorder %s21, 1
      %p119 = por %p117, %p118
      %p121 = scmp.ne.s32.totalorder %s106, %s120
      %p122 = scmp.eq.s32.totalorder %s21, 0
      %p123 = por %p121, %p122
      %s125 = sadd.s32 %s124, 1
      %p128 = scmp.eq.s32.totalorder %s15, 1
      %p129 = scmp.ne.s32.totalorder %s124, %s126
      %p130 = scmp.eq.s32.totalorder %s15, 0
      %p131 = por %p129, %p130
      %p132 = scmp.ne.s32.totalorder %s124, %s126
      %p133 = scmp.eq.s32.totalorder %s20, 1
      %p134 = por %p132, %p133
      %p135 = scmp.ne.s32.totalorder %s126, %s127
      %p136 = scmp.eq.s32.totalorder %s20, 0
      %p137 = por %p135, %p136
      %p138 = scmp.ne.s32.totalorder %s126, %s127
      %p139 = scmp.eq.s32.totalorder %s21, 1
      %p140 = por %p138, %p139
      %p142 = scmp.ne.s32.totalorder %s127, %s141
      %p143 = scmp.eq.s32.totalorder %s21, 0
      %p144 = por %p142, %p143
      %s145 = ssub.s32 %s22, %s34
      %s146 = ssub.s32 %s23, %s30
      %s147 = sor.u32 %s145, %s146
      %p148 = scmp.eq.s32.totalorder %s147, 0
      %s150 = sadd.s32 %s149, 1
      %s151 = scalar_select %p148, %s149, %s150
      %p154 = pneg %p148
      %p155 = scmp.eq.s32.totalorder %s15, 1
      %p156 = por %p154, %p155
      %p157 = scmp.ne.s32.totalorder %s149, %s152
      %p158 = scmp.eq.s32.totalorder %s15, 0
      %p159 = por %p157, %p158
      %p160 = scmp.ne.s32.totalorder %s149, %s152
      %p161 = scmp.eq.s32.totalorder %s20, 1
      %p162 = por %p160, %p161
      %p163 = scmp.ne.s32.totalorder %s152, %s153
      %p164 = scmp.eq.s32.totalorder %s20, 0
      %p165 = por %p163, %p164
      %p166 = scmp.ne.s32.totalorder %s152, %s153
      %p167 = scmp.eq.s32.totalorder %s21, 1
      %p168 = por %p166, %p167
      %p170 = scmp.ne.s32.totalorder %s153, %s169
      %p171 = scmp.eq.s32.totalorder %s21, 0
      %p172 = por %p170, %p171
      %p173 = scmp.le.s32.totalorder 1, %s15
      %p174 = scmp.lt.s32.totalorder %s15, 3
      %p175 = pnand %p173, %p174
      %p176 = pneg %p175
      // Predicated region
      $region9: #{tpu_custom_call.1} parent=5 // pred_check
        _
      $region10: #{tpu_custom_call.1} parent=5 // pred_check_branch
        %178 = sbr.rel (%p175) target = $region12
      $region11: #{tpu_custom_call.1} parent=5 // pred_region
        %s179 = ssub.s32 %s15, 1
        // Predicated region
        $region13: #{tpu_custom_call.1} parent=11 // pred_check
          %p180 = pneg %p74
        $region14: #{tpu_custom_call.1} parent=11 // pred_check_branch
          %182 = sbr.rel (%p180) target = $region16
        $region15: #{tpu_custom_call.1} parent=11 // pred_region
          _
        $region16: #{tpu_custom_call.1} parent=11 // pred_fallthru
          _
        // Predicated region
        $region17: #{tpu_custom_call.1} parent=11 // pred_check
          %p183 = pneg %p95
        $region18: #{tpu_custom_call.1} parent=11 // pred_check_branch
          %185 = sbr.rel (%p183) target = $region20
        $region19: #{tpu_custom_call.1} parent=11 // pred_region
          _
        $region20: #{tpu_custom_call.1} parent=11 // pred_fallthru
          _
        // Predicated region
        $region21: #{tpu_custom_call.1} parent=11 // pred_check
          %p186 = pneg %p116
        $region22: #{tpu_custom_call.1} parent=11 // pred_check_branch
          %188 = sbr.rel (%p186) target = $region24
        $region23: #{tpu_custom_call.1} parent=11 // pred_region
          _
        $region24: #{tpu_custom_call.1} parent=11 // pred_fallthru
          _
        // Predicated region
        $region25: #{tpu_custom_call.1} parent=11 // pred_check
          %p189 = pneg %p137
        $region26: #{tpu_custom_call.1} parent=11 // pred_check_branch
          %191 = sbr.rel (%p189) target = $region28
        $region27: #{tpu_custom_call.1} parent=11 // pred_region
          _
        $region28: #{tpu_custom_call.1} parent=11 // pred_fallthru
          _
      $region12: #{tpu_custom_call.1} parent=5 // pred_fallthru
        _
      %p192 = scmp.lt.s32.totalorder %s15, 2
      // Predicated region
      $region29: #{tpu_custom_call.1} parent=5 // pred_check
        %p193 = pneg %p192
      $region30: #{tpu_custom_call.1} parent=5 // pred_check_branch
        %195 = sbr.rel (%p193) target = $region32
      $region31: #{tpu_custom_call.1} parent=5 // pred_region
        // Predicated region
        $region33: #{tpu_custom_call.1} parent=31 // pred_check
          %p196 = pneg %p47
        $region34: #{tpu_custom_call.1} parent=31 // pred_check_branch
          %198 = sbr.rel (%p196) target = $region36
        $region35: #{tpu_custom_call.1} parent=31 // pred_region
          %p199 = scmp.lt.s32.totalorder %s22, 1
          %s200 = scalar_select %p199, %s22, 1
          %s201 = smul.addr %s200, 4
          %s202 = smul.addr %s201, 8
          %s203 = scalar_lea.vmem %s0, %s202
        $region36: #{tpu_custom_call.1} parent=31 // pred_fallthru
          _
      $region32: #{tpu_custom_call.1} parent=5 // pred_fallthru
        _
      %p204 = scmp.le.s32.totalorder 1, %s15
      %p205 = scmp.lt.s32.totalorder %s15, 3
      %p206 = pnand %p204, %p205
      %p207 = pneg %p206
      // Predicated region
      $region37: #{tpu_custom_call.1} parent=5 // pred_check
        _
      $region38: #{tpu_custom_call.1} parent=5 // pred_check_branch
        %209 = sbr.rel (%p206) target = $region40
      $region39: #{tpu_custom_call.1} parent=5 // pred_region
        %s210 = ssub.s32 %s15, 1
        %p211 = scmp.lt.s32.totalorder %s24, 1
        %s212 = scalar_select %p211, %s24, 1
        %s213 = smul.addr %s212, 4
        %s214 = smul.addr %s213, 8
        %s215 = scalar_lea.vmem %s0, %s214
        %p216 = pneg %p53
        %p217 = pneg %p50
        %p218 = pneg %p74
        %p219 = pneg %p71
        %p220 = pneg %p95
        %p221 = pneg %p92
        %p222 = pneg %p116
        %p223 = pneg %p113
        %p224 = pneg %p137
        %p225 = pneg %p134
        %p226 = pneg %p165
        %p227 = pneg %p162
        %s228 = sand.u32 %s152, 1
        %s229 = scalar_lea.sflag [#allocation7], %s228
        %s230 = sand.u32 %s152, 1
        %s231 = smul.addr %s230, 32
        %s232 = scalar_lea.vmem [#allocation6], %s231
        %p233 = scmp.lt.s32.totalorder %s24, 1
        %s234 = scalar_select %p233, %s24, 1
        %s235 = smul.addr %s234, 4
        %s236 = smul.addr %s235, 8
        %s237 = scalar_lea.vmem %s0, %s236
        %s239 = smul.u32 %s25, 128
        %p240 = scmp.eq.s32.totalorder %s25, 0
        // Predicated region
        $region41: #{tpu_custom_call.1} parent=39 // pred_check
          %p241 = pneg %p240
        $region42: #{tpu_custom_call.1} parent=39 // pred_check_branch
          %243 = sbr.rel (%p241) target = $region44
        $region43: #{tpu_custom_call.1} parent=39 // pred_region
          %v244 = vld [vmem:[%s237] sm:$0xff]
          %v245 = vld [vmem:[%s237 + $0x8] sm:$0xff]
          %v246 = vld [vmem:[%s237 + $0x10] sm:$0xff]
          %v247 = vld [vmem:[%s237 + $0x18] sm:$0xff]
          %v248 = vld [vmem:[%s1] sm:$0xff]
          %v249 = vld [vmem:[%s1 + $0x8] sm:$0xff]
          %v250 = vld [vmem:[%s1 + $0x10] sm:$0xff]
          %v251 = vld [vmem:[%s1 + $0x18] sm:$0xff]
          %v252 = vld [vmem:[%s1 + $0x20] sm:$0xff]
          %v253 = vld [vmem:[%s2] sm:$0xff]
          %v254 = vld [vmem:[%s2 + $0x8] sm:$0xff]
          %v255 = vld [vmem:[%s2 + $0x10] sm:$0xff]
          %v256 = vld [vmem:[%s2 + $0x18] sm:$0xff]
          %v257 = vld [vmem:[%s2 + $0x20] sm:$0xff]
          %259 = vset.pattern.permute.xlu0 0
          %260 = vperm.xlu0 %259, %v253
          %v261 = vpop.permute.xlu0 %260
          %264 = vset.pattern.permute.xlu0 0
          %265 = vperm.xlu0 %264, %v254
          %v266 = vpop.permute.xlu0 %265
          %269 = vset.pattern.permute.xlu0 0
          %270 = vperm.xlu0 %269, %v255
          %v271 = vpop.permute.xlu0 %270
          %274 = vset.pattern.permute.xlu0 0
          %275 = vperm.xlu0 %274, %v256
          %v276 = vpop.permute.xlu0 %275
          %279 = vset.pattern.permute.xlu0 0
          %280 = vperm.xlu0 %279, %v257
          %v281 = vpop.permute.xlu0 %280
          %vm283 = vcmask 261120
          %v285 = vsel %vm283, %v248, 0
          %v288 = vsel %vm283, %v249, 0
          %v291 = vsel %vm283, %v250, 0
          %v294 = vsel %vm283, %v251, 0
          %v297 = vsel %vm283, %v252, 0
          %299 = vmatprep.subr.mxu0 0.0
          %300 = vmatpush1.msra.mxu0 %v244
          %301 = vmatprep.subr.mxu0 0.0
          %302 = vmatpush1.msra.mxu0 %v245
          %303 = vmatprep.subr.mxu0 0.0
          %304 = vmatpush1.msra.mxu0 %v246
          %305 = vmatprep.subr.mxu0 0.0
          %306 = vmatpush1.msra.mxu0 %v247
          %307 = vmatprep.subr.mxu0 0.0
          %308 = vmatpush1.msra.mxu0 0.0
          %309 = vmatprep.subr.mxu0 0.0
          %310 = vmatpush1.msra.mxu0 0.0
          %311 = vmatprep.subr.mxu0 0.0
          %312 = vmatpush1.msra.mxu0 0.0
          %313 = vmatprep.subr.mxu0 0.0
          %314 = vmatpush1.msra.mxu0 0.0
          %315 = vmatprep.subr.mxu0 0.0
          %316 = vmatpush1.msra.mxu0 0.0
          %317 = vmatprep.subr.mxu0 0.0
          %318 = vmatpush1.msra.mxu0 0.0
          %319 = vmatprep.subr.mxu0 0.0
          %320 = vmatpush1.msra.mxu0 0.0
          %321 = vmatprep.subr.mxu0 0.0
          %322 = vmatpush1.msra.mxu0 0.0
          %323 = vmatprep.subr.mxu0 0.0
          %324 = vmatpush1.msra.mxu0 0.0
          %325 = vmatprep.subr.mxu0 0.0
          %326 = vmatpush1.msra.mxu0 0.0
          %327 = vmatprep.subr.mxu0 0.0
          %328 = vmatpush1.msra.mxu0 0.0
          %329 = vmatprep.subr.mxu0 0.0
          %330 = vmatpush1.msra.mxu0 0.0
          %331 = vmatprep.subr.mxu0 0.0
          %332 = vmatpush1.msra.mxu0 0.0
          %333 = vmatprep.subr.mxu0 0.0
          %334 = vmatpush1.msra.mxu0 0.0
          %335 = vmatprep.subr.mxu0 0.0
          %336 = vmatpush1.msra.mxu0 0.0
          %337 = vmatprep.subr.mxu0 0.0
          %338 = vmatpush1.msra.mxu0 0.0
          %339 = vmatprep.subr.mxu0 0.0
          %340 = vmatpush1.msra.mxu0 0.0
          %341 = vmatprep.subr.mxu0 0.0
          %342 = vmatpush1.msra.mxu0 0.0
          %343 = vmatprep.subr.mxu0 0.0
          %344 = vmatpush1.msra.mxu0 0.0
          %345 = vmatprep.subr.mxu0 0.0
          %346 = vmatpush1.msra.mxu0 0.0
          %347 = vmatprep.subr.mxu0 0.0
          %348 = vmatpush1.msra.mxu0 0.0
          %349 = vmatprep.subr.mxu0 0.0
          %350 = vmatpush1.msra.mxu0 0.0
          %351 = vmatprep.subr.mxu0 0.0
          %352 = vmatpush1.msra.mxu0 0.0
          %353 = vmatprep.subr.mxu0 0.0
          %354 = vmatpush1.msra.mxu0 0.0
          %355 = vmatprep.subr.mxu0 0.0
          %356 = vmatpush1.msra.mxu0 0.0
          %357 = vmatprep.subr.mxu0 0.0
          %358 = vmatpush1.msra.mxu0 0.0
          %359 = vmatprep.subr.mxu0 0.0
          %360 = vmatpush1.msra.mxu0 0.0
          %361 = vmatprep.subr.mxu0 0.0
          %362 = vmatpush1.msra.mxu0 0.0
          %363 = vmatprep.mubr.f32.mxu0 0.0
          %364 = vmatmul.mubr.f32.gmra.mrb[0].mxu0 %v285
          %v365 = vpop.f32.mrb[0].mxu0
          %v366 = vadd.f32 %v261, %v365
          %v367 = vpop.f32.mrb[0].mxu0
          %368 = vmatprep.mubr.f32.mxu0 0.0
          %369 = vmatmul.mubr.f32.gmra.mrb[0].mxu0 %v288
          %v370 = vpop.f32.mrb[0].mxu0
          %v371 = vadd.f32 %v266, %v370
          %v372 = vpop.f32.mrb[0].mxu0
          %373 = vmatprep.mubr.f32.mxu0 0.0
          %374 = vmatmul.mubr.f32.gmra.mrb[0].mxu0 %v291
          %v375 = vpop.f32.mrb[0].mxu0
          %v376 = vadd.f32 %v271, %v375
          %v377 = vpop.f32.mrb[0].mxu0
          %378 = vmatprep.mubr.f32.mxu0 0.0
          %379 = vmatmul.mubr.f32.gmra.mrb[0].mxu0 %v294
          %v380 = vpop.f32.mrb[0].mxu0
          %v381 = vadd.f32 %v276, %v380
          %v382 = vpop.f32.mrb[0].mxu0
          %383 = vmatprep.mubr.f32.mxu0 0.0
          %384 = vmatmul.mubr.f32.gmra.mrb[0].mxu0 %v297
          %v385 = vpop.f32.mrb[0].mxu0
          %v386 = vadd.f32 %v281, %v385
          %v387 = vpop.f32.mrb[0].mxu0
          %388 = vdwg.mxu0
          %v389 = vpack.c.bf16 %v366, %v366
          %390 = vst [vmem:[#allocation2] sm:$0x3] %v389
          %v393 = vunpack.c.l.s4 1983009808
          %v394 = vunpack.c.0.s8 %v393
          %v395 = vlaneseq
          %v396 = vshrl.u32 %v395, 7
          %v397 = vsub.s32 %v394, %v396
          %v398 = vrot.slane %v389, %v397
          %v399 = vcombine.high %v398, %v398
          %401 = vst [vmem:[#allocation3] sm:$0x3] %v399
          %v402 = vpack.c.bf16 %v376, %v371
          %v403 = vpack.c.bf16 %v386, %v381
          %404 = vst [vmem:[#allocation4] sm:$0xff] %v402
          %405 = vst [vmem:[#allocation4 + $0x8] sm:$0xff] %v403
        $region44: #{tpu_custom_call.1} parent=39 // pred_fallthru
          _
        %s406 = sshra.s32 %s239, 7
        %s407 = sand.u32 %s239, 127
        %s408 = smul.addr %s406, 2
        %s409 = scalar_lea.vmem [#allocation2], %s408
        %v410 = vld [vmem:[%s409] sm:$0x3]
        %v411 = vld [vmem:[#allocation3] sm:$0x3]
        %v412 = vlaneseq
        %v413 = vshrl.u32 %v412, 7
        %v414 = vadd.s32 %v413, 8
        %v415 = vadd.s32 %v413, 16
        %v416 = vadd.s32 %v413, 24
        %v417 = vadd.s32 %v413, 32
        %v418 = vadd.s32 %v413, 40
        %v419 = vadd.s32 %v413, 48
        %v420 = vadd.s32 %v413, 56
        %v421 = vadd.s32 %v413, 64
        %v422 = vadd.s32 %v413, 72
        %v423 = vadd.s32 %v413, 80
        %v424 = vadd.s32 %v413, 88
        %v425 = vadd.s32 %v413, 96
        %v426 = vadd.s32 %v413, 104
        %v427 = vadd.s32 %v413, 112
        %v428 = vadd.s32 %v413, 120
        %vm429 = vcmp.lt.s32.totalorder %v413, 64
        %vm430 = vcmp.lt.s32.totalorder %v414, 64
        %vm431 = vcmp.lt.s32.totalorder %v415, 64
        %vm432 = vcmp.lt.s32.totalorder %v416, 64
        %vm433 = vcmp.lt.s32.totalorder %v417, 64
        %vm434 = vcmp.lt.s32.totalorder %v418, 64
        %vm435 = vcmp.lt.s32.totalorder %v419, 64
        %vm436 = vcmp.lt.s32.totalorder %v420, 64
        %vm437 = vcmp.lt.s32.totalorder %v421, 64
        %vm438 = vcmp.lt.s32.totalorder %v422, 64
        %vm439 = vcmp.lt.s32.totalorder %v423, 64
        %vm440 = vcmp.lt.s32.totalorder %v424, 64
        %vm441 = vcmp.lt.s32.totalorder %v425, 64
        %vm442 = vcmp.lt.s32.totalorder %v426, 64
        %vm443 = vcmp.lt.s32.totalorder %v427, 64
        %vm444 = vcmp.lt.s32.totalorder %v428, 64
        %v445 = vsel %vm429, 0.0, -1e+30
        %v446 = vsel %vm430, 0.0, -1e+30
        %v447 = vsel %vm431, 0.0, -1e+30
        %v448 = vsel %vm432, 0.0, -1e+30
        %v449 = vsel %vm433, 0.0, -1e+30
        %v450 = vsel %vm434, 0.0, -1e+30
        %v451 = vsel %vm435, 0.0, -1e+30
        %v452 = vsel %vm436, 0.0, -1e+30
        %v453 = vsel %vm437, 0.0, -1e+30
        %v454 = vsel %vm438, 0.0, -1e+30
        %v455 = vsel %vm439, 0.0, -1e+30
        %v456 = vsel %vm440, 0.0, -1e+30
        %v457 = vsel %vm441, 0.0, -1e+30
        %v458 = vsel %vm442, 0.0, -1e+30
        %v459 = vsel %vm443, 0.0, -1e+30
        %v460 = vsel %vm444, 0.0, -1e+30
        %461 = vxpose.xlu0.c.b16.start [1/8] %v411, 128
        %462 = vxpose.xlu0.c.b16.cont [2/8] 0, 128
        %463 = vxpose.xlu0.c.b16.cont [3/8] 0, 128
        %464 = vxpose.xlu0.c.b16.cont [4/8] 0, 128
        %465 = vxpose.xlu0.c.b16.cont [5/8] 0, 128
        %466 = vxpose.xlu0.c.b16.cont [6/8] 0, 128
        %467 = vxpose.xlu0.c.b16.cont [7/8] 0, 128
        %468 = vxpose.xlu0.c.b16.end [8/8] 0, 128
        %v469 = vpop.trf.xlu0
        %v470 = vpop.trf.xlu0
        %v471 = vpop.trf.xlu0
        %v472 = vpop.trf.xlu0
        %v473 = vpop.trf.xlu0
        %v474 = vpop.trf.xlu0
        %v475 = vpop.trf.xlu0
        %v476 = vpop.trf.xlu0
        %vm477 = vcmask 31744
        %v479 = vsel %vm477, %v469, 0
        %v482 = vsel %vm477, %v470, 0
        %v485 = vsel %vm477, %v471, 0
        %v488 = vsel %vm477, %v472, 0
        %v491 = vsel %vm477, %v473, 0
        %v494 = vsel %vm477, %v474, 0
        %v497 = vsel %vm477, %v475, 0
        %v500 = vsel %vm477, %v476, 0
        %vm502 = vcmask 1041408
        %v504 = vsel %vm502, %v410, 0
        %506 = vmatprep.subr.bf16.mxu0 0
        %507 = vmatpush1.bf16.msra.mxu0 %v504
        %508 = vmatprep.subr.bf16.mxu0 0
        %509 = vmatpush1.bf16.msra.mxu0 0
        %510 = vmatprep.subr.bf16.mxu0 0
        %511 = vmatpush1.bf16.msra.mxu0 0
        %512 = vmatprep.subr.bf16.mxu0 0
        %513 = vmatpush1.bf16.msra.mxu0 0
        %514 = vmatprep.subr.bf16.mxu0 0
        %515 = vmatpush1.bf16.msra.mxu0 0
        %516 = vmatprep.subr.bf16.mxu0 0
        %517 = vmatpush1.bf16.msra.mxu0 0
        %518 = vmatprep.subr.bf16.mxu0 0
        %519 = vmatpush1.bf16.msra.mxu0 0
        %520 = vmatprep.subr.bf16.mxu0 0
        %521 = vmatpush1.bf16.msra.mxu0 0
        %522 = vmatprep.subr.bf16.mxu0 0
        %523 = vmatpush1.bf16.msra.mxu0 0
        %524 = vmatprep.subr.bf16.mxu0 0
        %525 = vmatpush1.bf16.msra.mxu0 0
        %526 = vmatprep.subr.bf16.mxu0 0
        %527 = vmatpush1.bf16.msra.mxu0 0
        %528 = vmatprep.subr.bf16.mxu0 0
        %529 = vmatpush1.bf16.msra.mxu0 0
        %530 = vmatprep.subr.bf16.mxu0 0
        %531 = vmatpush1.bf16.msra.mxu0 0
        %532 = vmatprep.subr.bf16.mxu0 0
        %533 = vmatpush1.bf16.msra.mxu0 0
        %534 = vmatprep.subr.bf16.mxu0 0
        %535 = vmatpush1.bf16.msra.mxu0 0
        %536 = vmatprep.subr.bf16.mxu0 0
        %537 = vmatpush1.bf16.msra.mxu0 0
        %538 = vmatprep.mubr.bf16.mxu0 0
        %539 = vmatmul.mubr.bf16.gmra.mrb[0].mxu0 %v479
        %v540 = vpop.f32.mrb[0].mxu0
        %v541 = vadd.f32 %v445, %v540
        %v542 = vpop.f32.mrb[0].mxu0
        %v543 = vpop.f32.mrb[0].mxu0
        %v544 = vadd.f32 %v446, %v543
        %v545 = vpop.f32.mrb[0].mxu0
        %546 = vmatprep.mubr.bf16.mxu0 0
        %547 = vmatmul.mubr.bf16.gmra.mrb[0].mxu0 %v482
        %v548 = vpop.f32.mrb[0].mxu0
        %v549 = vadd.f32 %v447, %v548
        %v550 = vpop.f32.mrb[0].mxu0
        %v551 = vpop.f32.mrb[0].mxu0
        %v552 = vadd.f32 %v448, %v551
        %v553 = vpop.f32.mrb[0].mxu0
        %554 = vmatprep.mubr.bf16.mxu0 0
        %555 = vmatmul.mubr.bf16.gmra.mrb[0].mxu0 %v485
        %v556 = vpop.f32.mrb[0].mxu0
        %v557 = vadd.f32 %v449, %v556
        %v558 = vpop.f32.mrb[0].mxu0
        %v559 = vpop.f32.mrb[0].mxu0
        %v560 = vadd.f32 %v450, %v559
        %v561 = vpop.f32.mrb[0].mxu0
        %562 = vmatprep.mubr.bf16.mxu0 0
        %563 = vmatmul.mubr.bf16.gmra.mrb[0].mxu0 %v488
        %v564 = vpop.f32.mrb[0].mxu0
        %v565 = vadd.f32 %v451, %v564
        %v566 = vpop.f32.mrb[0].mxu0
        %v567 = vpop.f32.mrb[0].mxu0
        %v568 = vadd.f32 %v452, %v567
        %v569 = vpop.f32.mrb[0].mxu0
        %570 = vmatprep.mubr.bf16.mxu0 0
        %571 = vmatmul.mubr.bf16.gmra.mrb[0].mxu0 %v491
        %v572 = vpop.f32.mrb[0].mxu0
        %v573 = vadd.f32 %v453, %v572
        %v574 = vpop.f32.mrb[0].mxu0
        %v575 = vpop.f32.mrb[0].mxu0
        %v576 = vadd.f32 %v454, %v575
        %v577 = vpop.f32.mrb[0].mxu0
        %578 = vmatprep.mubr.bf16.mxu0 0
        %579 = vmatmul.mubr.bf16.gmra.mrb[0].mxu0 %v494
        %v580 = vpop.f32.mrb[0].mxu0
        %v581 = vadd.f32 %v455, %v580
        %v582 = vpop.f32.mrb[0].mxu0
        %v583 = vpop.f32.mrb[0].mxu0
        %v584 = vadd.f32 %v456, %v583
        %v585 = vpop.f32.mrb[0].mxu0
        %586 = vmatprep.mubr.bf16.mxu0 0
        %587 = vmatmul.mubr.bf16.gmra.mrb[0].mxu0 %v497
        %v588 = vpop.f32.mrb[0].mxu0
        %v589 = vadd.f32 %v457, %v588
        %v590 = vpop.f32.mrb[0].mxu0
        %v591 = vpop.f32.mrb[0].mxu0
        %v592 = vadd.f32 %v458, %v591
        %v593 = vpop.f32.mrb[0].mxu0
        %594 = vmatprep.mubr.bf16.mxu0 0
        %595 = vmatmul.mubr.bf16.gmra.mrb[0].mxu0 %v500
        %v596 = vpop.f32.mrb[0].mxu0
        %v597 = vadd.f32 %v459, %v596
        %v598 = vpop.f32.mrb[0].mxu0
        %v599 = vpop.f32.mrb[0].mxu0
        %v600 = vadd.f32 %v460, %v599
        %v601 = vpop.f32.mrb[0].mxu0
        %602 = vdwg.mxu0
        %v603 = vmax.f32 %v541, %v557
        %v604 = vmax.f32 %v544, %v560
        %v605 = vmax.f32 %v549, %v565
        %v606 = vmax.f32 %v552, %v568
        %v607 = vmax.f32 %v603, %v573
        %v608 = vmax.f32 %v604, %v576
        %v609 = vmax.f32 %v605, %v581
        %v610 = vmax.f32 %v606, %v584
        %v611 = vmax.f32 %v607, %v589
        %v612 = vmax.f32 %v608, %v592
        %v613 = vmax.f32 %v609, %v597
        %v614 = vmax.f32 %v610, %v600
        %v615 = vmax.f32 %v611, %v612
        %v616 = vmax.f32 %v613, %v614
        %v617 = vmax.f32 %v615, %v616
        %v618 = vrot.slane %v617, 4
        %v619 = vmax.f32 %v617, %v618
        %v620 = vrot.slane %v619, 2
        %v621 = vmax.f32 %v619, %v620
        %v622 = vrot.slane %v621, 1
        %v623 = vmax.f32 %v621, %v622
        %v624 = vsub.f32 %v541, %v623
        %v625 = vsub.f32 %v544, %v623
        %v626 = vsub.f32 %v549, %v623
        %v627 = vsub.f32 %v552, %v623
        %v628 = vsub.f32 %v557, %v623
        %v629 = vsub.f32 %v560, %v623
        %v630 = vsub.f32 %v565, %v623
        %v631 = vsub.f32 %v568, %v623
        %v632 = vsub.f32 %v573, %v623
        %v633 = vsub.f32 %v576, %v623
        %v634 = vsub.f32 %v581, %v623
        %v635 = vsub.f32 %v584, %v623
        %v636 = vsub.f32 %v589, %v623
        %v637 = vsub.f32 %v592, %v623
        %v638 = vsub.f32 %v597, %v623
        %v639 = vsub.f32 %v600, %v623
        %v640 = vmul.f32 %v624, 1.442695
        %v641 = vpow.pop %v640
        %v642 = vmul.f32 %v625, 1.442695
        %v643 = vpow.pop %v642
        %v644 = vmul.f32 %v626, 1.442695
        %v645 = vpow.pop %v644
        %v646 = vmul.f32 %v627, 1.442695
        %v647 = vpow.pop %v646
        %v648 = vmul.f32 %v628, 1.442695
        %v649 = vpow.pop %v648
        %v650 = vmul.f32 %v629, 1.442695
        %v651 = vpow.pop %v650
        %v652 = vmul.f32 %v630, 1.442695
        %v653 = vpow.pop %v652
        %v654 = vmul.f32 %v631, 1.442695
        %v655 = vpow.pop %v654
        %v656 = vmul.f32 %v632, 1.442695
        %v657 = vpow.pop %v656
        %v658 = vmul.f32 %v633, 1.442695
        %v659 = vpow.pop %v658
        %v660 = vmul.f32 %v634, 1.442695
        %v661 = vpow.pop %v660
        %v662 = vmul.f32 %v635, 1.442695
        %v663 = vpow.pop %v662
        %v664 = vmul.f32 %v636, 1.442695
        %v665 = vpow.pop %v664
        %v666 = vmul.f32 %v637, 1.442695
        %v667 = vpow.pop %v666
        %v668 = vmul.f32 %v638, 1.442695
        %v669 = vpow.pop %v668
        %v670 = vmul.f32 %v639, 1.442695
        %v671 = vpow.pop %v670
        %v672 = vadd.f32 %v641, %v643
        %v673 = vadd.f32 %v672, %v645
        %v674 = vadd.f32 %v673, %v647
        %v675 = vadd.f32 %v674, %v649
        %v676 = vadd.f32 %v675, %v651
        %v677 = vadd.f32 %v676, %v653
        %v678 = vadd.f32 %v677, %v655
        %v679 = vadd.f32 %v678, %v657
        %v680 = vadd.f32 %v679, %v659
        %v681 = vadd.f32 %v680, %v661
        %v682 = vadd.f32 %v681, %v663
        %v683 = vadd.f32 %v682, %v665
        %v684 = vadd.f32 %v683, %v667
        %v685 = vadd.f32 %v684, %v669
        %v686 = vadd.f32 %v685, %v671
        %v687 = vrot.slane %v686, 4
        %v688 = vadd.f32 %v686, %v687
        %v689 = vrot.slane %v688, 2
        %v690 = vadd.f32 %v688, %v689
        %v691 = vrot.slane %v690, 1
        %v692 = vadd.f32 %v690, %v691
        %v693 = vld [vmem:[#allocation4] sm:$0xff]
        %v694 = vld [vmem:[#allocation4 + $0x8] sm:$0xff]
        %v695 = vpack.c.bf16 %v643, %v641
        %v696 = vpack.c.bf16 %v647, %v645
        %v697 = vpack.c.bf16 %v651, %v649
        %v698 = vpack.c.bf16 %v655, %v653
        %v699 = vpack.c.bf16 %v659, %v657
        %v700 = vpack.c.bf16 %v663, %v661
        %v701 = vpack.c.bf16 %v667, %v665
        %v702 = vpack.c.bf16 %v671, %v669
        %703 = vmatprep.subr.bf16.mxu0 0
        %704 = vmatpush1.bf16.msra.mxu0 %v695
        %705 = vmatprep.subr.bf16.mxu0 0
        %706 = vmatpush1.bf16.msra.mxu0 %v696
        %707 = vmatprep.subr.bf16.mxu0 0
        %708 = vmatpush1.bf16.msra.mxu0 %v697
        %709 = vmatprep.subr.bf16.mxu0 0
        %710 = vmatpush1.bf16.msra.mxu0 %v698
        %711 = vmatprep.subr.bf16.mxu0 0
        %712 = vmatpush1.bf16.msra.mxu0 %v699
        %713 = vmatprep.subr.bf16.mxu0 0
        %714 = vmatpush1.bf16.msra.mxu0 %v700
        %715 = vmatprep.subr.bf16.mxu0 0
        %716 = vmatpush1.bf16.msra.mxu0 %v701
        %717 = vmatprep.subr.bf16.mxu0 0
        %718 = vmatpush1.bf16.msra.mxu0 %v702
        %719 = vmatprep.subr.bf16.mxu0 0
        %720 = vmatpush1.bf16.msra.mxu0 0
        %721 = vmatprep.subr.bf16.mxu0 0
        %722 = vmatpush1.bf16.msra.mxu0 0
        %723 = vmatprep.subr.bf16.mxu0 0
        %724 = vmatpush1.bf16.msra.mxu0 0
        %725 = vmatprep.subr.bf16.mxu0 0
        %726 = vmatpush1.bf16.msra.mxu0 0
        %727 = vmatprep.subr.bf16.mxu0 0
        %728 = vmatpush1.bf16.msra.mxu0 0
        %729 = vmatprep.subr.bf16.mxu0 0
        %730 = vmatpush1.bf16.msra.mxu0 0
        %731 = vmatprep.subr.bf16.mxu0 0
        %732 = vmatpush1.bf16.msra.mxu0 0
        %733 = vmatprep.subr.bf16.mxu0 0
        %734 = vmatpush1.bf16.msra.mxu0 0
        %735 = vmatprep.mubr.bf16.mxu0 0
        %736 = vmatmul.mubr.bf16.gmra.mrb[0].mxu0 %v693
        %v737 = vpop.f32.mrb[0].mxu0
        %v738 = vadd.f32 0.0, %v737
        %v739 = vpop.f32.mrb[0].mxu0
        %v740 = vpop.f32.mrb[0].mxu0
        %v741 = vadd.f32 0.0, %v740
        %v742 = vpop.f32.mrb[0].mxu0
        %743 = vmatprep.mubr.bf16.mxu0 0
        %744 = vmatmul.mubr.bf16.gmra.mrb[0].mxu0 %v694
        %v745 = vpop.f32.mrb[0].mxu0
        %v746 = vadd.f32 0.0, %v745
        %v747 = vpop.f32.mrb[0].mxu0
        %v748 = vpop.f32.mrb[0].mxu0
        %v749 = vadd.f32 0.0, %v748
        %v750 = vpop.f32.mrb[0].mxu0
        %751 = vdwg.mxu0
        %v752 = vrcp.pop %v692
        %v753 = vmul.f32 %v738, %v752
        %v754 = vmul.f32 %v741, %v752
        %v755 = vmul.f32 %v746, %v752
        %v756 = vmul.f32 %v749, %v752
        %v757 = vld [vmem:[%s3] sm:$0xff]
        %v758 = vld [vmem:[%s3 + $0x8] sm:$0xff]
        %v759 = vld [vmem:[%s3 + $0x10] sm:$0xff]
        %v760 = vld [vmem:[%s3 + $0x18] sm:$0xff]
        %762 = vset.pattern.permute.xlu0 0
        %763 = vperm.xlu0 %762, %v757
        %v764 = vpop.permute.xlu0 %763
        %767 = vset.pattern.permute.xlu0 0
        %768 = vperm.xlu0 %767, %v758
        %v769 = vpop.permute.xlu0 %768
        %772 = vset.pattern.permute.xlu0 0
        %773 = vperm.xlu0 %772, %v759
        %v774 = vpop.permute.xlu0 %773
        %777 = vset.pattern.permute.xlu0 0
        %778 = vperm.xlu0 %777, %v760
        %v779 = vpop.permute.xlu0 %778
        %v781 = vadd.f32 %v753, %v764
        %v782 = vadd.f32 %v754, %v769
        %v783 = vadd.f32 %v755, %v774
        %v784 = vadd.f32 %v756, %v779
        %s785 = scalar_lea.vmem %s237, %s406
        %v786 = vld [vmem:[%s785] sm:$0xff]
        %v787 = vld [vmem:[%s785 + $0x8] sm:$0xff]
        %v788 = vld [vmem:[%s785 + $0x10] sm:$0xff]
        %v789 = vld [vmem:[%s785 + $0x18] sm:$0xff]
        %s790 = sld [smem:[#allocation5]]
        %v791 = vstv %s790
        %v792 = vmul.f32 %v791, %v781
        %v793 = vmul.f32 %v791, %v782
        %v794 = vmul.f32 %v791, %v783
        %v795 = vmul.f32 %v791, %v784
        %v796 = vadd.f32 %v792, %v786
        %v797 = vadd.f32 %v793, %v787
        %v798 = vadd.f32 %v794, %v788
        %v799 = vadd.f32 %v795, %v789
        %800 = vst [vmem:[%s232] sm:$0xff] %v796
        %801 = vst [vmem:[%s232 + $0x8] sm:$0xff] %v797
        %802 = vst [vmem:[%s232 + $0x10] sm:$0xff] %v798
        %803 = vst [vmem:[%s232 + $0x18] sm:$0xff] %v799
        %s804 = sand.u32 %s152, 1
        %s805 = scalar_lea.sflag [#allocation7], %s804
        %s806 = sand.u32 %s152, 1
        %s807 = smul.addr %s806, 32
        %s808 = scalar_lea.vmem [#allocation6], %s807
        // Predicated region
        $region45: #{tpu_custom_call.1} parent=39 // pred_check
          %p809 = pneg %p162
        $region46: #{tpu_custom_call.1} parent=39 // pred_check_branch
          %811 = sbr.rel (%p809) target = $region48
        $region47: #{tpu_custom_call.1} parent=39 // pred_region
          %s813 = ssub.s32 512, 512
          %814 = vsyncadd %s805, %s813
          %s815 = smul.addr %s24, 4
          %s816 = sadd.s32 %s25, %s815
          %s817 = smul.addr %s816, 128
          %s818 = scalar_lea.hbm %s5, %s817
          %s819 = sshll.u32 %s808, 4
          %s820 = int_to_ptr.vmem [resolvable:$true] %s819
          %825 = dma.vmem_to_hbm [thread:$0]  %s820, 512, %s818, %s805, 128, 128, 8
        $region48: #{tpu_custom_call.1} parent=39 // pred_fallthru
          _
      $region40: #{tpu_custom_call.1} parent=5 // pred_fallthru
        _
      %p826 = scmp.le.s32.totalorder 2, %s15
      // Predicated region
      $region49: #{tpu_custom_call.1} parent=5 // pred_check
        %p827 = pneg %p826
      $region50: #{tpu_custom_call.1} parent=5 // pred_check_branch
        %829 = sbr.rel (%p827) target = $region52
      $region51: #{tpu_custom_call.1} parent=5 // pred_region
        %s830 = ssub.s32 %s15, 2
        // Predicated region
        $region53: #{tpu_custom_call.1} parent=51 // pred_check
          %p831 = pneg %p168
        $region54: #{tpu_custom_call.1} parent=51 // pred_check_branch
          %833 = sbr.rel (%p831) target = $region56
        $region55: #{tpu_custom_call.1} parent=51 // pred_region
          %s834 = sand.u32 %s153, 1
          %s835 = scalar_lea.sflag [#allocation7], %s834
          %s836 = sand.u32 %s153, 1
          %s837 = smul.addr %s836, 32
          %s838 = scalar_lea.vmem [#allocation6], %s837
          %839 = dma.done %s835, 512
        $region56: #{tpu_custom_call.1} parent=51 // pred_fallthru
          _
      $region52: #{tpu_custom_call.1} parent=5 // pred_fallthru
        _
    $region6: #{tpu_custom_call.1} parent=1 // loop_footer
      %s19 = sadd.s32 1, %s15
    $region7: #{tpu_custom_call.1} parent=1 // loop_footer_branch
      %14 = sbr.rel target = $region3
    $region8: #{tpu_custom_call.1} parent=1 // loop_exit
      _
    %840 = vsyncpa [#allocation7], 1
    %s841 = scalar_lea.sflag [#allocation7], 1
    %842 = vsyncpa %s841, 1

</llo_original>
